<compile_context>
chip_gen: v5e
topology: v5e:2x2
jax: 0.10.0
libtpu: 0.0.40
codegen_flags: <defaults>
</compile_context>

<pallas_src>
from functools import partial

import jax
import jax.numpy as jnp
from jax import lax
from jax.experimental import pallas as pl
from jax.experimental.pallas import tpu as pltpu


def cross_encoder_kernel(bias_ref, x_ref, w_ref, scores_t_ref, ploss_ref):
    # x_ref:        [tile_b, G*H] bf16 pooled features (one streamed tile)
    # w_ref:        [G, G*H]      f32  block-diagonal head weight, pre-scaled by 1/T
    # bias_ref:     (1,)          f32  SMEM scalar (head bias, pre-scaled by 1/T)
    # scores_t_ref: [G, tile_b]   f32  lane-dense scores (transposed)
    # ploss_ref:    [1, tile_b]   f32  per-example CE loss (target index 0)

    # HBM path stays bf16; cast to f32 in VMEM (VPU) so the dot is F32xF32=F32
    # everywhere (MXU on hardware, DotThunk in interpret mode).
    x = x_ref[...].astype(jnp.float32)                             # [tile_b, GH]

    # NT matmul on the MXU: contract the minor dims of both operands,
    # producing the lane-dense [G, tile_b] scores directly (no XLU transpose,
    # no lane-padded [tile_b, G] intermediate).
    scores_t = lax.dot_general(
        w_ref[...], x,
        dimension_numbers=(((1,), (1,)), ((), ())),
        preferred_element_type=jnp.float32) + bias_ref[0]          # [G, tile_b]

    # CrossEntropy with target label 0 for every group (stable logsumexp):
    #   loss_b = logsumexp(scores[:, b]) - scores[0, b]
    m = jnp.max(scores_t, axis=0, keepdims=True)                   # [1, tile_b]
    lse = jnp.log(jnp.sum(jnp.exp(scores_t - m), axis=0, keepdims=True)) + m
    per_example = lse - scores_t[0:1, :]                           # [1, tile_b]

    scores_t_ref[...] = scores_t
    ploss_ref[...] = per_example


def _vmem_limit_bytes():
    """Generation-aware scoped-VMEM limit: ~75% of physical, capped at 96 MiB.

    v7x: 64 MiB physical  -> 48 MiB scoped.
    v5e/v6e: 128 MiB      -> 96 MiB scoped.
    Falls back to the v7x-safe 48 MiB if hardware can't be queried
    (e.g. interpret mode on CPU)."""
    try:
        cap = int(pltpu.get_tpu_info().vmem_capacity_bytes)
    except Exception:
        cap = 64 * 1024 * 1024
    return min(cap * 3 // 4, 96 * 1024 * 1024)


def _pick_tile_b(B, GH, x_budget_bytes):
    """Largest lane-dense tile (multiple of 128) dividing B such that the
    double-buffered bf16 x tile plus its in-kernel f32 cast stays inside
    `x_budget_bytes`, while keeping >= 2 grid steps (megacore on v7x)."""
    bytes_per_row = 2 * GH * 2 + GH * 4        # 2x bf16 (double buffer) + f32 cast
    max_by_vmem = max((x_budget_bytes // bytes_per_row) // 128 * 128, 128)
    upper = min(max(B // 2, 128), max_by_vmem)
    tile = 128
    t = 256
    while t <= upper:
        if B % t == 0:
            tile = t
        t += 128
    return tile


@partial(jax.jit, static_argnames=("tile_b",))
def cross_encoder_forward(x, w, bias, temperature, tile_b=None):
    """x: [B, G, H] pooled features (bf16), w: [H] head weight, bias: [1],
    temperature: [1].  Returns (scores [B, G] f32, loss scalar f32)."""
    B, G, H = x.shape
    GH = G * H

    vmem_limit = _vmem_limit_bytes()
    if tile_b is None:
        tile_b = _pick_tile_b(B, GH, x_budget_bytes=vmem_limit * 3 // 4)
    assert B % tile_b == 0, "B must be a multiple of tile_b"
    assert tile_b % 128 == 0, "tile_b must be lane-dense (multiple of 128)"
    n_tiles = B // tile_b

    # ---- Layout plumbing in the wrapper (tiny XLA ops) ----
    x2d = x.reshape(B, GH)                                   # contiguous reshape
    inv_temp = (1.0 / temperature[0]).astype(jnp.float32)    # hoisted reciprocal
    # Block-diagonal head weight, already transposed to [G, GH] and pre-scaled
    # by 1/T (f32, resident in VMEM across the whole grid).
    # TODO(synk): cache w_bd outside the train step if G*H grows large; at
    # G=8, H=128 the rebuild per call is negligible.
    w_scaled = w.astype(jnp.float32) * inv_temp                       # [H]
    w_bd = (jnp.eye(G, dtype=jnp.float32)[:, :, None]
            * w_scaled[None, None, :]).reshape(G, GH)                 # [G, GH] f32
    bias_scaled = bias.astype(jnp.float32) * inv_temp                 # (1,) f32

    cost = pl.CostEstimate(
        flops=2 * B * GH * G,
        transcendentals=B * (G + 1),
        bytes_accessed=(x2d.size * x2d.dtype.itemsize
                        + w_bd.size * 4 + (G * B + B) * 4 + 4),
    )

    scores_t, ploss = pl.pallas_call(
        cross_encoder_kernel,
        out_shape=(
            jax.ShapeDtypeStruct((G, B), jnp.float32),        # scores (transposed)
            jax.ShapeDtypeStruct((1, B), jnp.float32),        # per-example loss
        ),
        grid=(n_tiles,),
        in_specs=[
            pl.BlockSpec(memory_space=pltpu.MemorySpace.SMEM),   # bias/T scalar
            pl.BlockSpec((tile_b, GH), lambda i: (i, 0)),        # x tile (streamed)
            pl.BlockSpec((G, GH), lambda i: (0, 0)),             # head weight (resident)
        ],
        out_specs=(
            pl.BlockSpec((G, tile_b), lambda i: (0, i)),         # lane-dense scores
            pl.BlockSpec((1, tile_b), lambda i: (0, i)),         # lane-dense per-ex loss
        ),
        compiler_params=pltpu.CompilerParams(
            dimension_semantics=("parallel",),                   # megacore on v7x
            vmem_limit_bytes=vmem_limit,
        ),
        cost_estimate=cost,
    )(bias_scaled, x2d, w_bd)

    scores = scores_t.T                 # [B, G]  wrapper-side layout plumbing
    loss = jnp.mean(ploss)              # CrossEntropyLoss(reduction='mean')
    return scores, loss


def reference_forward(x, w, bias, temperature):
    xf = x.astype(jnp.float32)
    wf = w.astype(jnp.float32)
    logits = jnp.sum(xf * wf[None, None, :], axis=-1) + bias[0]
    scores = logits / temperature[0]
    lse = jax.scipy.special.logsumexp(scores, axis=-1)
    loss = jnp.mean(lse - scores[:, 0])
    return scores, loss


if __name__ == "__main__":
    # Small demo shapes: B = 512 groups, train_group_size G = 8, pooled dim
    # H = 128.  The auto-picked tile_b is 256 here -> 2 pipelined grid steps
    # (one per v7x TensorCore).  Production benchmarking should use B in the
    # thousands; at this size wall-clock is dominated by dispatch overhead.
    B, G, H = 512, 8, 128
    key = jax.random.PRNGKey(0)
    kx, kw, kb = jax.random.split(key, 3)

    x = jax.random.normal(kx, (B, G, H), dtype=jnp.float32).astype(jnp.bfloat16)
    w = (jax.random.normal(kw, (H,), dtype=jnp.float32)
         / jnp.sqrt(jnp.float32(H))).astype(jnp.bfloat16)          # head weight [H]
    bias = jax.random.normal(kb, (1,), dtype=jnp.float32) * 0.01   # head bias
    temperature = jnp.array([0.5], dtype=jnp.float32)              # train_args.temperature

    scores, loss = cross_encoder_forward(x, w, bias, temperature)
    jax.block_until_ready((scores, loss))

    scores_ref, loss_ref = reference_forward(x, w, bias, temperature)
    assert jnp.allclose(scores, scores_ref, atol=1e-3, rtol=1e-3), "scores mismatch"
    assert jnp.allclose(loss, loss_ref, atol=1e-3, rtol=1e-3), "loss mismatch"

    # TODO(synk): eval-mode branch (argmax over groups) and dist_gather_tensor
    # (torch.distributed all_gather) are outside the training hot path.
    print("KERNEL_OK")
</pallas_src>

<mosaic_0001>
module attributes {stable_mosaic.version = 11 : i64} {
  func.func @cross_encoder_kernel(%arg0: i32, %arg1: memref<1xf32, #tpu.memory_space<smem>>, %arg2: memref<256x1024xbf16, #tpu.memory_space<vmem>>, %arg3: memref<8x1024xf32, #tpu.memory_space<vmem>>, %arg4: memref<8x256xf32, #tpu.memory_space<vmem>>, %arg5: memref<1x256xf32, #tpu.memory_space<vmem>>) attributes {dimension_semantics = [#tpu.dimension_semantics<parallel>], iteration_bounds = array<i64: 2>, scalar_prefetch = 0 : i64, scratch_operands = 0 : i64, tpu.core_type = #tpu.core_type<tc>, window_params = [{transform_indices = @transform_0, window_bounds = array<i64: 1>}, {transform_indices = @transform_1, window_bounds = array<i64: 256, 1024>}, {pipeline_mode = #tpu.pipeline_mode<synchronous>, transform_indices = @transform_2, window_bounds = array<i64: 8, 1024>}, {transform_indices = @transform_3, window_bounds = array<i64: 8, 256>}, {transform_indices = @transform_4, window_bounds = array<i64: 1, 256>}]} {
    %c0 = arith.constant 0 : index
    %c0_0 = arith.constant 0 : index
    %0 = vector.load %arg2[%c0, %c0_0] : memref<256x1024xbf16, #tpu.memory_space<vmem>>, vector<256x1024xbf16>
    %1 = arith.extf %0 : vector<256x1024xbf16> to vector<256x1024xf32>
    %c0_1 = arith.constant 0 : index
    %c0_2 = arith.constant 0 : index
    %2 = vector.load %arg3[%c0_1, %c0_2] : memref<8x1024xf32, #tpu.memory_space<vmem>>, vector<8x1024xf32>
    %cst = arith.constant dense<0.000000e+00> : vector<8x256xf32>
    %3 = tpu.matmul %2, %1, %cst {dimension_numbers = #tpu.dot_dimension_numbers<[1], [1], [0], [0], [0, 0, 1, 0], [], []>} : vector<8x1024xf32>, vector<256x1024xf32>, vector<8x256xf32> -> vector<8x256xf32>
    %c0_3 = arith.constant 0 : index
    %4 = memref.load %arg1[%c0_3] : memref<1xf32, #tpu.memory_space<smem>>
    %5 = vector.broadcast %4 : f32 to vector<8x256xf32>
    %6 = arith.addf %3, %5 : vector<8x256xf32>
    %cst_4 = arith.constant dense<0xFF800000> : vector<256xf32>
    %7 = vector.multi_reduction <maximumf>, %6, %cst_4 [0] : vector<8x256xf32> to vector<256xf32>
    %8 = vector.shape_cast %7 : vector<256xf32> to vector<1x256xf32>
    %9 = vector.broadcast %8 : vector<1x256xf32> to vector<8x256xf32>
    %10 = arith.subf %6, %9 : vector<8x256xf32>
    %11 = math.exp %10 : vector<8x256xf32>
    %cst_5 = arith.constant dense<0.000000e+00> : vector<256xf32>
    %12 = vector.multi_reduction <add>, %11, %cst_5 [0] : vector<8x256xf32> to vector<256xf32>
    %13 = vector.shape_cast %12 : vector<256xf32> to vector<1x256xf32>
    %14 = math.log %13 : vector<1x256xf32>
    %15 = arith.addf %14, %8 : vector<1x256xf32>
    %16 = vector.extract_strided_slice %6 {offsets = [0, 0], sizes = [1, 256], strides = [1, 1]} : vector<8x256xf32> to vector<1x256xf32>
    %17 = arith.subf %15, %16 : vector<1x256xf32>
    %c0_6 = arith.constant 0 : index
    %c0_7 = arith.constant 0 : index
    %18 = vector.load %arg4[%c0_6, %c0_7] : memref<8x256xf32, #tpu.memory_space<vmem>>, vector<8x256xf32>
    tpu.vector_store %arg4[%c0_6, %c0_7], %6 {strides = array<i32>} : memref<8x256xf32, #tpu.memory_space<vmem>>, vector<8x256xf32>,
    %c0_8 = arith.constant 0 : index
    %c0_9 = arith.constant 0 : index
    %19 = vector.load %arg5[%c0_8, %c0_9] : memref<1x256xf32, #tpu.memory_space<vmem>>, vector<1x256xf32>
    tpu.vector_store %arg5[%c0_8, %c0_9], %17 {strides = array<i32>} : memref<1x256xf32, #tpu.memory_space<vmem>>, vector<1x256xf32>,
    return
  }
  func.func @transform_0(%arg0: i32) -> i32 {
    %c0_i32 = arith.constant 0 : i32
    %c0_i32_0 = arith.constant 0 : i32
    return %c0_i32 : i32
  }
  func.func @transform_1(%arg0: i32) -> (i32, i32) {
    %c0_i32 = arith.constant 0 : i32
    %c0_i32_0 = arith.constant 0 : i32
    return %arg0, %c0_i32 : i32, i32
  }
  func.func @transform_2(%arg0: i32) -> (i32, i32) {
    %c0_i32 = arith.constant 0 : i32
    %c0_i32_0 = arith.constant 0 : i32
    %c0_i32_1 = arith.constant 0 : i32
    return %c0_i32, %c0_i32_0 : i32, i32
  }
  func.func @transform_3(%arg0: i32) -> (i32, i32) {
    %c0_i32 = arith.constant 0 : i32
    %c0_i32_0 = arith.constant 0 : i32
    return %c0_i32, %arg0 : i32, i32
  }
  func.func @transform_4(%arg0: i32) -> (i32, i32) {
    %c0_i32 = arith.constant 0 : i32
    %c0_i32_0 = arith.constant 0 : i32
    return %c0_i32, %arg0 : i32, i32
  }
}

</mosaic_0001>

<llo_original>
// kernel: cross_encoder_forward.1
$region0: #{cross_encoder_forward.1}
  #allocation0 [shape = 'u32[]', space=smem, size = 0x4, offset = 0x4, fixed_abs, tag = 'smem constant byte address 0x4 - core index']
  #allocation1 [shape = 'u32[72,128]{1,0:T(1,128)}', space=vmem, size = 0x9000, scoped, tag = 'internal scratch']
  #allocation2 [shape = 'f32[1]{0:T(128)S(6)}', space=smem, size = 0x200, scoped, tag = 'scoped memory for cross_encoder_forward.1']
  %s0 = inlined_call_operand.<no memory space> [shape: f32[1], index: 0, kind: input, shape index: {}]
  %s1 = inlined_call_operand.vmem [shape: bf16[512,1024], index: 1, kind: input, shape index: {}]
  %s2 = inlined_call_operand.vmem [shape: f32[8,1024], index: 2, kind: input, shape index: {}]
  %s3 = inlined_call_operand.hbm [shape: f32[8,512], index: 3, kind: output, shape index: {0}]
  %s4 = inlined_call_operand.vmem [shape: f32[1,512], index: 4, kind: output, shape index: {1}]
  %5 = xla_tuple %s3, %s4
  %s6 = sld [smem:[#allocation0]]
  $region53: #{cross_encoder_forward.1} parent=0
    _
  %s8 = ssub.s32 1, %s6
  %s9 = scalar_select 0, %s8, %s6
  %10 = sst [smem:[#allocation2]] %s0
  $region1: #{cross_encoder_forward.1} parent=0
    #allocation3 [shape = 'u8[16384]{0}', space=vmem, size = 0x4000, scoped, tag = 'output window, operand 0']
    #allocation4 [shape = 's32[2]{0}', space=sflag, size = 0x8, scoped, tag = 'scoped memory for cross_encoder_forward.1']
    %11 = vsyncpa [#allocation4], 0
    %s12 = scalar_lea.sflag [#allocation4], 1
    %13 = vsyncpa %s12, 0
    loop: start=0, step=1, limit=4
    $region2: #{cross_encoder_forward.1} parent=1 // loop_pre_header
      _
    $region3: #{cross_encoder_forward.1} parent=1 // loop_header
      %s15 = sphi 0, %s19
      %p16 = scmp.ge.s32.totalorder %s15, 4
      %s23 = sphi 0, %s23
      %s25 = sphi 0, %s23
      %s26 = sphi 0, %s25
      %s40 = sphi 0, %s26
      %s46 = sphi 0, %s48
      %s49 = sphi 0, %s46
      %s50 = sphi 0, %s49
      %s66 = sphi 0, %s50
      %s70 = sphi 0, %s70
      %s72 = sphi 0, %s70
      %s73 = sphi 0, %s72
      %s87 = sphi 0, %s73
      %s93 = sphi 0, %s95
      %s96 = sphi 0, %s93
      %s97 = sphi 0, %s96
      %s113 = sphi 0, %s97
      %s119 = sphi 0, %s121
      %s122 = sphi 0, %s119
      %s123 = sphi 0, %s122
      %s139 = sphi 0, %s123
    $region4: #{cross_encoder_forward.1} parent=1 // loop_header_branch
      %18 = sbr.rel (%p16) target = $region8
    $region5: #{cross_encoder_forward.1} parent=1 // loop_body
      %s20 = ssub.s32 %s15, 1
      %s21 = ssub.s32 %s15, 2
      %s22 = sadd.s32 %s15, 1
      %s24 = sadd.s32 %s23, 1
      %p27 = scmp.eq.s32.totalorder %s15, 1
      %p28 = scmp.ne.s32.totalorder %s23, %s25
      %p29 = scmp.eq.s32.totalorder %s15, 0
      %p30 = por %p28, %p29
      %p31 = scmp.ne.s32.totalorder %s23, %s25
      %p32 = scmp.eq.s32.totalorder %s20, 1
      %p33 = por %p31, %p32
      %p34 = scmp.ne.s32.totalorder %s25, %s26
      %p35 = scmp.eq.s32.totalorder %s20, 0
      %p36 = por %p34, %p35
      %p37 = scmp.ne.s32.totalorder %s25, %s26
      %p38 = scmp.eq.s32.totalorder %s21, 1
      %p39 = por %p37, %p38
      %p41 = scmp.ne.s32.totalorder %s26, %s40
      %p42 = scmp.eq.s32.totalorder %s21, 0
      %p43 = por %p41, %p42
      %s44 = ssub.s32 %s15, %s22
      %p45 = scmp.eq.s32.totalorder %s44, 0
      %s47 = sadd.s32 %s46, 1
      %s48 = scalar_select %p45, %s46, %s47
      %p51 = pneg %p45
      %p52 = scmp.eq.s32.totalorder %s15, 1
      %p53 = por %p51, %p52
      %p54 = scmp.ne.s32.totalorder %s46, %s49
      %p55 = scmp.eq.s32.totalorder %s15, 0
      %p56 = por %p54, %p55
      %p57 = scmp.ne.s32.totalorder %s46, %s49
      %p58 = scmp.eq.s32.totalorder %s20, 1
      %p59 = por %p57, %p58
      %p60 = scmp.ne.s32.totalorder %s49, %s50
      %p61 = scmp.eq.s32.totalorder %s20, 0
      %p62 = por %p60, %p61
      %p63 = scmp.ne.s32.totalorder %s49, %s50
      %p64 = scmp.eq.s32.totalorder %s21, 1
      %p65 = por %p63, %p64
      %p67 = scmp.ne.s32.totalorder %s50, %s66
      %p68 = scmp.eq.s32.totalorder %s21, 0
      %p69 = por %p67, %p68
      %s71 = sadd.s32 %s70, 1
      %p74 = scmp.eq.s32.totalorder %s15, 1
      %p75 = scmp.ne.s32.totalorder %s70, %s72
      %p76 = scmp.eq.s32.totalorder %s15, 0
      %p77 = por %p75, %p76
      %p78 = scmp.ne.s32.totalorder %s70, %s72
      %p79 = scmp.eq.s32.totalorder %s20, 1
      %p80 = por %p78, %p79
      %p81 = scmp.ne.s32.totalorder %s72, %s73
      %p82 = scmp.eq.s32.totalorder %s20, 0
      %p83 = por %p81, %p82
      %p84 = scmp.ne.s32.totalorder %s72, %s73
      %p85 = scmp.eq.s32.totalorder %s21, 1
      %p86 = por %p84, %p85
      %p88 = scmp.ne.s32.totalorder %s73, %s87
      %p89 = scmp.eq.s32.totalorder %s21, 0
      %p90 = por %p88, %p89
      %s91 = ssub.s32 %s15, %s22
      %p92 = scmp.eq.s32.totalorder %s91, 0
      %s94 = sadd.s32 %s93, 1
      %s95 = scalar_select %p92, %s93, %s94
      %p98 = pneg %p92
      %p99 = scmp.eq.s32.totalorder %s15, 1
      %p100 = por %p98, %p99
      %p101 = scmp.ne.s32.totalorder %s93, %s96
      %p102 = scmp.eq.s32.totalorder %s15, 0
      %p103 = por %p101, %p102
      %p104 = scmp.ne.s32.totalorder %s93, %s96
      %p105 = scmp.eq.s32.totalorder %s20, 1
      %p106 = por %p104, %p105
      %p107 = scmp.ne.s32.totalorder %s96, %s97
      %p108 = scmp.eq.s32.totalorder %s20, 0
      %p109 = por %p107, %p108
      %p110 = scmp.ne.s32.totalorder %s96, %s97
      %p111 = scmp.eq.s32.totalorder %s21, 1
      %p112 = por %p110, %p111
      %p114 = scmp.ne.s32.totalorder %s97, %s113
      %p115 = scmp.eq.s32.totalorder %s21, 0
      %p116 = por %p114, %p115
      %s117 = ssub.s32 %s15, %s22
      %p118 = scmp.eq.s32.totalorder %s117, 0
      %s120 = sadd.s32 %s119, 1
      %s121 = scalar_select %p118, %s119, %s120
      %p124 = pneg %p118
      %p125 = scmp.eq.s32.totalorder %s15, 1
      %p126 = por %p124, %p125
      %p127 = scmp.ne.s32.totalorder %s119, %s122
      %p128 = scmp.eq.s32.totalorder %s15, 0
      %p129 = por %p127, %p128
      %p130 = scmp.ne.s32.totalorder %s119, %s122
      %p131 = scmp.eq.s32.totalorder %s20, 1
      %p132 = por %p130, %p131
      %p133 = scmp.ne.s32.totalorder %s122, %s123
      %p134 = scmp.eq.s32.totalorder %s20, 0
      %p135 = por %p133, %p134
      %p136 = scmp.ne.s32.totalorder %s122, %s123
      %p137 = scmp.eq.s32.totalorder %s21, 1
      %p138 = por %p136, %p137
      %p140 = scmp.ne.s32.totalorder %s123, %s139
      %p141 = scmp.eq.s32.totalorder %s21, 0
      %p142 = por %p140, %p141
      %p143 = scmp.le.s32.totalorder 1, %s15
      %p144 = scmp.lt.s32.totalorder %s15, 3
      %p145 = pnand %p143, %p144
      %p146 = pneg %p145
      // Predicated region
      $region9: #{cross_encoder_forward.1} parent=5 // pred_check
        _
      $region10: #{cross_encoder_forward.1} parent=5 // pred_check_branch
        %148 = sbr.rel (%p145) target = $region12
      $region11: #{cross_encoder_forward.1} parent=5 // pred_region
        %s149 = ssub.s32 %s15, 1
        // Predicated region
        $region13: #{cross_encoder_forward.1} parent=11 // pred_check
          %p150 = pneg %p36
        $region14: #{cross_encoder_forward.1} parent=11 // pred_check_branch
          %152 = sbr.rel (%p150) target = $region16
        $region15: #{cross_encoder_forward.1} parent=11 // pred_region
          _
        $region16: #{cross_encoder_forward.1} parent=11 // pred_fallthru
          _
        // Predicated region
        $region17: #{cross_encoder_forward.1} parent=11 // pred_check
          %p153 = pneg %p83
        $region18: #{cross_encoder_forward.1} parent=11 // pred_check_branch
          %155 = sbr.rel (%p153) target = $region20
        $region19: #{cross_encoder_forward.1} parent=11 // pred_region
          _
        $region20: #{cross_encoder_forward.1} parent=11 // pred_fallthru
          _
      $region12: #{cross_encoder_forward.1} parent=5 // pred_fallthru
        _
      %p156 = scmp.lt.s32.totalorder %s15, 2
      // Predicated region
      $region21: #{cross_encoder_forward.1} parent=5 // pred_check
        %p157 = pneg %p156
      $region22: #{cross_encoder_forward.1} parent=5 // pred_check_branch
        %159 = sbr.rel (%p157) target = $region24
      $region23: #{cross_encoder_forward.1} parent=5 // pred_region
        // Predicated region
        $region25: #{cross_encoder_forward.1} parent=23 // pred_check
          %p160 = pneg %p56
        $region26: #{cross_encoder_forward.1} parent=23 // pred_check_branch
          %162 = sbr.rel (%p160) target = $region28
        $region27: #{cross_encoder_forward.1} parent=23 // pred_region
          %s163 = smul.u32 32, %s15
          %p164 = scmp.lt.s32.totalorder %s163, 63
          %s165 = scalar_select %p164, %s163, 63
          %s166 = smul.addr %s165, 8
          %s167 = smul.addr %s166, 4
          %s168 = scalar_lea.vmem %s1, %s167
          %s169 = smul.u32 32, %s15
        $region28: #{cross_encoder_forward.1} parent=23 // pred_fallthru
          _
      $region24: #{cross_encoder_forward.1} parent=5 // pred_fallthru
        _
      %p170 = scmp.le.s32.totalorder 1, %s15
      %p171 = scmp.lt.s32.totalorder %s15, 3
      %p172 = pnand %p170, %p171
      %p173 = pneg %p172
      // Predicated region
      $region29: #{cross_encoder_forward.1} parent=5 // pred_check
        _
      $region30: #{cross_encoder_forward.1} parent=5 // pred_check_branch
        %175 = sbr.rel (%p172) target = $region32
      $region31: #{cross_encoder_forward.1} parent=5 // pred_region
        %s176 = ssub.s32 %s15, 1
        %p177 = pneg %p36
        %p178 = pneg %p33
        %s179 = smul.u32 32, %s20
        %p180 = scmp.lt.s32.totalorder %s179, 63
        %s181 = scalar_select %p180, %s179, 63
        %s182 = smul.addr %s181, 8
        %s183 = smul.addr %s182, 4
        %s184 = scalar_lea.vmem %s1, %s183
        %p185 = pneg %p62
        %p186 = pneg %p59
        %p187 = pneg %p83
        %p188 = pneg %p80
        %p189 = pneg %p109
        %p190 = pneg %p106
        %s191 = sand.u32 %s96, 1
        %s192 = scalar_lea.sflag [#allocation4], %s191
        %s193 = sand.u32 %s96, 1
        %s194 = smul.addr %s193, 16
        %s195 = scalar_lea.vmem [#allocation3], %s194
        %p196 = pneg %p135
        %p197 = pneg %p132
        %s198 = smul.u32 2, %s20
        %p199 = scmp.lt.s32.totalorder %s198, 3
        %s200 = scalar_select %p199, %s198, 3
        %s201 = scalar_lea.vmem %s4, %s200
        %s202 = smul.u32 32, %s20
        %p203 = scmp.lt.s32.totalorder %s202, 63
        %s204 = scalar_select %p203, %s202, 63
        %s205 = smul.addr %s204, 8
        %s206 = smul.addr %s205, 4
        %s207 = scalar_lea.vmem %s1, %s206
        %s208 = smul.u32 32, %s20
        %s209 = smul.u32 2, %s20
        %s210 = smul.u32 2, %s20
        %p211 = scmp.lt.s32.totalorder %s210, 3
        %s212 = scalar_select %p211, %s210, 3
        %s213 = scalar_lea.vmem %s4, %s212
        %s214 = smul.u32 2, %s20
        %v215 = vld [vmem:[%s207] sm:$0xff]
        %v216 = vld [vmem:[%s207 + $0x8] sm:$0xff]
        %v217 = vld [vmem:[%s207 + $0x10] sm:$0xff]
        %v218 = vld [vmem:[%s207 + $0x18] sm:$0xff]
        %v219 = vld [vmem:[%s207 + $0x20] sm:$0xff]
        %v220 = vld [vmem:[%s207 + $0x28] sm:$0xff]
        %v221 = vld [vmem:[%s207 + $0x30] sm:$0xff]
        %v222 = vld [vmem:[%s207 + $0x38] sm:$0xff]
        %v223 = vld [vmem:[%s207 + $0x40] sm:$0xff]
        %v224 = vld [vmem:[%s207 + $0x48] sm:$0xff]
        %v225 = vld [vmem:[%s207 + $0x50] sm:$0xff]
        %v226 = vld [vmem:[%s207 + $0x58] sm:$0xff]
        %v227 = vld [vmem:[%s207 + $0x60] sm:$0xff]
        %v228 = vld [vmem:[%s207 + $0x68] sm:$0xff]
        %v229 = vld [vmem:[%s207 + $0x70] sm:$0xff]
        %v230 = vld [vmem:[%s207 + $0x78] sm:$0xff]
        %v231 = vld [vmem:[%s207 + $0x80] sm:$0xff]
        %v232 = vld [vmem:[%s207 + $0x88] sm:$0xff]
        %v233 = vld [vmem:[%s207 + $0x90] sm:$0xff]
        %v234 = vld [vmem:[%s207 + $0x98] sm:$0xff]
        %v235 = vld [vmem:[%s207 + $0xa0] sm:$0xff]
        %v236 = vld [vmem:[%s207 + $0xa8] sm:$0xff]
        %v237 = vld [vmem:[%s207 + $0xb0] sm:$0xff]
        %v238 = vld [vmem:[%s207 + $0xb8] sm:$0xff]
        %v239 = vld [vmem:[%s207 + $0xc0] sm:$0xff]
        %v240 = vld [vmem:[%s207 + $0xc8] sm:$0xff]
        %v241 = vld [vmem:[%s207 + $0xd0] sm:$0xff]
        %v242 = vld [vmem:[%s207 + $0xd8] sm:$0xff]
        %v243 = vld [vmem:[%s207 + $0xe0] sm:$0xff]
        %v244 = vld [vmem:[%s207 + $0xe8] sm:$0xff]
        %v245 = vld [vmem:[%s207 + $0xf0] sm:$0xff]
        %v246 = vld [vmem:[%s207 + $0xf8] sm:$0xff]
        %v247 = vld [vmem:[%s207 + $0x100] sm:$0xff]
        %v248 = vld [vmem:[%s207 + $0x108] sm:$0xff]
        %v249 = vld [vmem:[%s207 + $0x110] sm:$0xff]
        %v250 = vld [vmem:[%s207 + $0x118] sm:$0xff]
        %v251 = vld [vmem:[%s207 + $0x120] sm:$0xff]
        %v252 = vld [vmem:[%s207 + $0x128] sm:$0xff]
        %v253 = vld [vmem:[%s207 + $0x130] sm:$0xff]
        %v254 = vld [vmem:[%s207 + $0x138] sm:$0xff]
        %v255 = vld [vmem:[%s207 + $0x140] sm:$0xff]
        %v256 = vld [vmem:[%s207 + $0x148] sm:$0xff]
        %v257 = vld [vmem:[%s207 + $0x150] sm:$0xff]
        %v258 = vld [vmem:[%s207 + $0x158] sm:$0xff]
        %v259 = vld [vmem:[%s207 + $0x160] sm:$0xff]
        %v260 = vld [vmem:[%s207 + $0x168] sm:$0xff]
        %v261 = vld [vmem:[%s207 + $0x170] sm:$0xff]
        %v262 = vld [vmem:[%s207 + $0x178] sm:$0xff]
        %v263 = vld [vmem:[%s207 + $0x180] sm:$0xff]
        %v264 = vld [vmem:[%s207 + $0x188] sm:$0xff]
        %v265 = vld [vmem:[%s207 + $0x190] sm:$0xff]
        %v266 = vld [vmem:[%s207 + $0x198] sm:$0xff]
        %v267 = vld [vmem:[%s207 + $0x1a0] sm:$0xff]
        %v268 = vld [vmem:[%s207 + $0x1a8] sm:$0xff]
        %v269 = vld [vmem:[%s207 + $0x1b0] sm:$0xff]
        %v270 = vld [vmem:[%s207 + $0x1b8] sm:$0xff]
        %v271 = vld [vmem:[%s207 + $0x1c0] sm:$0xff]
        %v272 = vld [vmem:[%s207 + $0x1c8] sm:$0xff]
        %v273 = vld [vmem:[%s207 + $0x1d0] sm:$0xff]
        %v274 = vld [vmem:[%s207 + $0x1d8] sm:$0xff]
        %v275 = vld [vmem:[%s207 + $0x1e0] sm:$0xff]
        %v276 = vld [vmem:[%s207 + $0x1e8] sm:$0xff]
        %v277 = vld [vmem:[%s207 + $0x1f0] sm:$0xff]
        %v278 = vld [vmem:[%s207 + $0x1f8] sm:$0xff]
        %v279 = vld [vmem:[%s207 + $0x200] sm:$0xff]
        %v280 = vld [vmem:[%s207 + $0x208] sm:$0xff]
        %v281 = vld [vmem:[%s207 + $0x210] sm:$0xff]
        %v282 = vld [vmem:[%s207 + $0x218] sm:$0xff]
        %v283 = vld [vmem:[%s207 + $0x220] sm:$0xff]
        %v284 = vld [vmem:[%s207 + $0x228] sm:$0xff]
        %v285 = vld [vmem:[%s207 + $0x230] sm:$0xff]
        %v286 = vld [vmem:[%s207 + $0x238] sm:$0xff]
        %v287 = vld [vmem:[%s207 + $0x240] sm:$0xff]
        %v288 = vld [vmem:[%s207 + $0x248] sm:$0xff]
        %v289 = vld [vmem:[%s207 + $0x250] sm:$0xff]
        %v290 = vld [vmem:[%s207 + $0x258] sm:$0xff]
        %v291 = vld [vmem:[%s207 + $0x260] sm:$0xff]
        %v292 = vld [vmem:[%s207 + $0x268] sm:$0xff]
        %v293 = vld [vmem:[%s207 + $0x270] sm:$0xff]
        %v294 = vld [vmem:[%s207 + $0x278] sm:$0xff]
        %v295 = vld [vmem:[%s207 + $0x280] sm:$0xff]
        %v296 = vld [vmem:[%s207 + $0x288] sm:$0xff]
        %v297 = vld [vmem:[%s207 + $0x290] sm:$0xff]
        %v298 = vld [vmem:[%s207 + $0x298] sm:$0xff]
        %v299 = vld [vmem:[%s207 + $0x2a0] sm:$0xff]
        %v300 = vld [vmem:[%s207 + $0x2a8] sm:$0xff]
        %v301 = vld [vmem:[%s207 + $0x2b0] sm:$0xff]
        %v302 = vld [vmem:[%s207 + $0x2b8] sm:$0xff]
        %v303 = vld [vmem:[%s207 + $0x2c0] sm:$0xff]
        %v304 = vld [vmem:[%s207 + $0x2c8] sm:$0xff]
        %v305 = vld [vmem:[%s207 + $0x2d0] sm:$0xff]
        %v306 = vld [vmem:[%s207 + $0x2d8] sm:$0xff]
        %v307 = vld [vmem:[%s207 + $0x2e0] sm:$0xff]
        %v308 = vld [vmem:[%s207 + $0x2e8] sm:$0xff]
        %v309 = vld [vmem:[%s207 + $0x2f0] sm:$0xff]
        %v310 = vld [vmem:[%s207 + $0x2f8] sm:$0xff]
        %v311 = vld [vmem:[%s207 + $0x300] sm:$0xff]
        %v312 = vld [vmem:[%s207 + $0x308] sm:$0xff]
        %v313 = vld [vmem:[%s207 + $0x310] sm:$0xff]
        %v314 = vld [vmem:[%s207 + $0x318] sm:$0xff]
        %v315 = vld [vmem:[%s207 + $0x320] sm:$0xff]
        %v316 = vld [vmem:[%s207 + $0x328] sm:$0xff]
        %v317 = vld [vmem:[%s207 + $0x330] sm:$0xff]
        %v318 = vld [vmem:[%s207 + $0x338] sm:$0xff]
        %v319 = vld [vmem:[%s207 + $0x340] sm:$0xff]
        %v320 = vld [vmem:[%s207 + $0x348] sm:$0xff]
        %v321 = vld [vmem:[%s207 + $0x350] sm:$0xff]
        %v322 = vld [vmem:[%s207 + $0x358] sm:$0xff]
        %v323 = vld [vmem:[%s207 + $0x360] sm:$0xff]
        %v324 = vld [vmem:[%s207 + $0x368] sm:$0xff]
        %v325 = vld [vmem:[%s207 + $0x370] sm:$0xff]
        %v326 = vld [vmem:[%s207 + $0x378] sm:$0xff]
        %v327 = vld [vmem:[%s207 + $0x380] sm:$0xff]
        %v328 = vld [vmem:[%s207 + $0x388] sm:$0xff]
        %v329 = vld [vmem:[%s207 + $0x390] sm:$0xff]
        %v330 = vld [vmem:[%s207 + $0x398] sm:$0xff]
        %v331 = vld [vmem:[%s207 + $0x3a0] sm:$0xff]
        %v332 = vld [vmem:[%s207 + $0x3a8] sm:$0xff]
        %v333 = vld [vmem:[%s207 + $0x3b0] sm:$0xff]
        %v334 = vld [vmem:[%s207 + $0x3b8] sm:$0xff]
        %v335 = vld [vmem:[%s207 + $0x3c0] sm:$0xff]
        %v336 = vld [vmem:[%s207 + $0x3c8] sm:$0xff]
        %v337 = vld [vmem:[%s207 + $0x3d0] sm:$0xff]
        %v338 = vld [vmem:[%s207 + $0x3d8] sm:$0xff]
        %v339 = vld [vmem:[%s207 + $0x3e0] sm:$0xff]
        %v340 = vld [vmem:[%s207 + $0x3e8] sm:$0xff]
        %v341 = vld [vmem:[%s207 + $0x3f0] sm:$0xff]
        %v342 = vld [vmem:[%s207 + $0x3f8] sm:$0xff]
        %v343 = vunpack.c.l.bf16 %v215
        %v344 = vunpack.c.h.bf16 %v215
        %v345 = vunpack.c.l.bf16 %v216
        %v346 = vunpack.c.h.bf16 %v216
        %v347 = vunpack.c.l.bf16 %v217
        %v348 = vunpack.c.h.bf16 %v217
        %v349 = vunpack.c.l.bf16 %v218
        %v350 = vunpack.c.h.bf16 %v218
        %v351 = vunpack.c.l.bf16 %v219
        %v352 = vunpack.c.h.bf16 %v219
        %v353 = vunpack.c.l.bf16 %v220
        %v354 = vunpack.c.h.bf16 %v220
        %v355 = vunpack.c.l.bf16 %v221
        %v356 = vunpack.c.h.bf16 %v221
        %v357 = vunpack.c.l.bf16 %v222
        %v358 = vunpack.c.h.bf16 %v222
        %v359 = vunpack.c.l.bf16 %v223
        %v360 = vunpack.c.h.bf16 %v223
        %v361 = vunpack.c.l.bf16 %v224
        %v362 = vunpack.c.h.bf16 %v224
        %v363 = vunpack.c.l.bf16 %v225
        %v364 = vunpack.c.h.bf16 %v225
        %v365 = vunpack.c.l.bf16 %v226
        %v366 = vunpack.c.h.bf16 %v226
        %v367 = vunpack.c.l.bf16 %v227
        %v368 = vunpack.c.h.bf16 %v227
        %v369 = vunpack.c.l.bf16 %v228
        %v370 = vunpack.c.h.bf16 %v228
        %v371 = vunpack.c.l.bf16 %v229
        %v372 = vunpack.c.h.bf16 %v229
        %v373 = vunpack.c.l.bf16 %v230
        %v374 = vunpack.c.h.bf16 %v230
        %v375 = vunpack.c.l.bf16 %v231
        %v376 = vunpack.c.h.bf16 %v231
        %v377 = vunpack.c.l.bf16 %v232
        %v378 = vunpack.c.h.bf16 %v232
        %v379 = vunpack.c.l.bf16 %v233
        %v380 = vunpack.c.h.bf16 %v233
        %v381 = vunpack.c.l.bf16 %v234
        %v382 = vunpack.c.h.bf16 %v234
        %v383 = vunpack.c.l.bf16 %v235
        %v384 = vunpack.c.h.bf16 %v235
        %v385 = vunpack.c.l.bf16 %v236
        %v386 = vunpack.c.h.bf16 %v236
        %v387 = vunpack.c.l.bf16 %v237
        %v388 = vunpack.c.h.bf16 %v237
        %v389 = vunpack.c.l.bf16 %v238
        %v390 = vunpack.c.h.bf16 %v238
        %v391 = vunpack.c.l.bf16 %v239
        %v392 = vunpack.c.h.bf16 %v239
        %v393 = vunpack.c.l.bf16 %v240
        %v394 = vunpack.c.h.bf16 %v240
        %v395 = vunpack.c.l.bf16 %v241
        %v396 = vunpack.c.h.bf16 %v241
        %v397 = vunpack.c.l.bf16 %v242
        %v398 = vunpack.c.h.bf16 %v242
        %v399 = vunpack.c.l.bf16 %v243
        %v400 = vunpack.c.h.bf16 %v243
        %v401 = vunpack.c.l.bf16 %v244
        %v402 = vunpack.c.h.bf16 %v244
        %v403 = vunpack.c.l.bf16 %v245
        %v404 = vunpack.c.h.bf16 %v245
        %v405 = vunpack.c.l.bf16 %v246
        %v406 = vunpack.c.h.bf16 %v246
        %v407 = vunpack.c.l.bf16 %v247
        %v408 = vunpack.c.h.bf16 %v247
        %v409 = vunpack.c.l.bf16 %v248
        %v410 = vunpack.c.h.bf16 %v248
        %v411 = vunpack.c.l.bf16 %v249
        %v412 = vunpack.c.h.bf16 %v249
        %v413 = vunpack.c.l.bf16 %v250
        %v414 = vunpack.c.h.bf16 %v250
        %v415 = vunpack.c.l.bf16 %v251
        %v416 = vunpack.c.h.bf16 %v251
        %v417 = vunpack.c.l.bf16 %v252
        %v418 = vunpack.c.h.bf16 %v252
        %v419 = vunpack.c.l.bf16 %v253
        %v420 = vunpack.c.h.bf16 %v253
        %v421 = vunpack.c.l.bf16 %v254
        %v422 = vunpack.c.h.bf16 %v254
        %v423 = vunpack.c.l.bf16 %v255
        %v424 = vunpack.c.h.bf16 %v255
        %v425 = vunpack.c.l.bf16 %v256
        %v426 = vunpack.c.h.bf16 %v256
        %v427 = vunpack.c.l.bf16 %v257
        %v428 = vunpack.c.h.bf16 %v257
        %v429 = vunpack.c.l.bf16 %v258
        %v430 = vunpack.c.h.bf16 %v258
        %v431 = vunpack.c.l.bf16 %v259
        %v432 = vunpack.c.h.bf16 %v259
        %v433 = vunpack.c.l.bf16 %v260
        %v434 = vunpack.c.h.bf16 %v260
        %v435 = vunpack.c.l.bf16 %v261
        %v436 = vunpack.c.h.bf16 %v261
        %v437 = vunpack.c.l.bf16 %v262
        %v438 = vunpack.c.h.bf16 %v262
        %v439 = vunpack.c.l.bf16 %v263
        %v440 = vunpack.c.h.bf16 %v263
        %v441 = vunpack.c.l.bf16 %v264
        %v442 = vunpack.c.h.bf16 %v264
        %v443 = vunpack.c.l.bf16 %v265
        %v444 = vunpack.c.h.bf16 %v265
        %v445 = vunpack.c.l.bf16 %v266
        %v446 = vunpack.c.h.bf16 %v266
        %v447 = vunpack.c.l.bf16 %v267
        %v448 = vunpack.c.h.bf16 %v267
        %v449 = vunpack.c.l.bf16 %v268
        %v450 = vunpack.c.h.bf16 %v268
        %v451 = vunpack.c.l.bf16 %v269
        %v452 = vunpack.c.h.bf16 %v269
        %v453 = vunpack.c.l.bf16 %v270
        %v454 = vunpack.c.h.bf16 %v270
        %v455 = vunpack.c.l.bf16 %v271
        %v456 = vunpack.c.h.bf16 %v271
        %v457 = vunpack.c.l.bf16 %v272
        %v458 = vunpack.c.h.bf16 %v272
        %v459 = vunpack.c.l.bf16 %v273
        %v460 = vunpack.c.h.bf16 %v273
        %v461 = vunpack.c.l.bf16 %v274
        %v462 = vunpack.c.h.bf16 %v274
        %v463 = vunpack.c.l.bf16 %v275
        %v464 = vunpack.c.h.bf16 %v275
        %v465 = vunpack.c.l.bf16 %v276
        %v466 = vunpack.c.h.bf16 %v276
        %v467 = vunpack.c.l.bf16 %v277
        %v468 = vunpack.c.h.bf16 %v277
        %v469 = vunpack.c.l.bf16 %v278
        %v470 = vunpack.c.h.bf16 %v278
        %v471 = vunpack.c.l.bf16 %v279
        %v472 = vunpack.c.h.bf16 %v279
        %v473 = vunpack.c.l.bf16 %v280
        %v474 = vunpack.c.h.bf16 %v280
        %v475 = vunpack.c.l.bf16 %v281
        %v476 = vunpack.c.h.bf16 %v281
        %v477 = vunpack.c.l.bf16 %v282
        %v478 = vunpack.c.h.bf16 %v282
        %v479 = vunpack.c.l.bf16 %v283
        %v480 = vunpack.c.h.bf16 %v283
        %v481 = vunpack.c.l.bf16 %v284
        %v482 = vunpack.c.h.bf16 %v284
        %v483 = vunpack.c.l.bf16 %v285
        %v484 = vunpack.c.h.bf16 %v285
        %v485 = vunpack.c.l.bf16 %v286
        %v486 = vunpack.c.h.bf16 %v286
        %v487 = vunpack.c.l.bf16 %v287
        %v488 = vunpack.c.h.bf16 %v287
        %v489 = vunpack.c.l.bf16 %v288
        %v490 = vunpack.c.h.bf16 %v288
        %v491 = vunpack.c.l.bf16 %v289
        %v492 = vunpack.c.h.bf16 %v289
        %v493 = vunpack.c.l.bf16 %v290
        %v494 = vunpack.c.h.bf16 %v290
        %v495 = vunpack.c.l.bf16 %v291
        %v496 = vunpack.c.h.bf16 %v291
        %v497 = vunpack.c.l.bf16 %v292
        %v498 = vunpack.c.h.bf16 %v292
        %v499 = vunpack.c.l.bf16 %v293
        %v500 = vunpack.c.h.bf16 %v293
        %v501 = vunpack.c.l.bf16 %v294
        %v502 = vunpack.c.h.bf16 %v294
        %v503 = vunpack.c.l.bf16 %v295
        %v504 = vunpack.c.h.bf16 %v295
        %v505 = vunpack.c.l.bf16 %v296
        %v506 = vunpack.c.h.bf16 %v296
        %v507 = vunpack.c.l.bf16 %v297
        %v508 = vunpack.c.h.bf16 %v297
        %v509 = vunpack.c.l.bf16 %v298
        %v510 = vunpack.c.h.bf16 %v298
        %v511 = vunpack.c.l.bf16 %v299
        %v512 = vunpack.c.h.bf16 %v299
        %v513 = vunpack.c.l.bf16 %v300
        %v514 = vunpack.c.h.bf16 %v300
        %v515 = vunpack.c.l.bf16 %v301
        %v516 = vunpack.c.h.bf16 %v301
        %v517 = vunpack.c.l.bf16 %v302
        %v518 = vunpack.c.h.bf16 %v302
        %v519 = vunpack.c.l.bf16 %v303
        %v520 = vunpack.c.h.bf16 %v303
        %v521 = vunpack.c.l.bf16 %v304
        %v522 = vunpack.c.h.bf16 %v304
        %v523 = vunpack.c.l.bf16 %v305
        %v524 = vunpack.c.h.bf16 %v305
        %v525 = vunpack.c.l.bf16 %v306
        %v526 = vunpack.c.h.bf16 %v306
        %v527 = vunpack.c.l.bf16 %v307
        %v528 = vunpack.c.h.bf16 %v307
        %v529 = vunpack.c.l.bf16 %v308
        %v530 = vunpack.c.h.bf16 %v308
        %v531 = vunpack.c.l.bf16 %v309
        %v532 = vunpack.c.h.bf16 %v309
        %v533 = vunpack.c.l.bf16 %v310
        %v534 = vunpack.c.h.bf16 %v310
        %v535 = vunpack.c.l.bf16 %v311
        %v536 = vunpack.c.h.bf16 %v311
        %v537 = vunpack.c.l.bf16 %v312
        %v538 = vunpack.c.h.bf16 %v312
        %v539 = vunpack.c.l.bf16 %v313
        %v540 = vunpack.c.h.bf16 %v313
        %v541 = vunpack.c.l.bf16 %v314
        %v542 = vunpack.c.h.bf16 %v314
        %v543 = vunpack.c.l.bf16 %v315
        %v544 = vunpack.c.h.bf16 %v315
        %v545 = vunpack.c.l.bf16 %v316
        %v546 = vunpack.c.h.bf16 %v316
        %v547 = vunpack.c.l.bf16 %v317
        %v548 = vunpack.c.h.bf16 %v317
        %v549 = vunpack.c.l.bf16 %v318
        %v550 = vunpack.c.h.bf16 %v318
        %v551 = vunpack.c.l.bf16 %v319
        %v552 = vunpack.c.h.bf16 %v319
        %v553 = vunpack.c.l.bf16 %v320
        %v554 = vunpack.c.h.bf16 %v320
        %v555 = vunpack.c.l.bf16 %v321
        %v556 = vunpack.c.h.bf16 %v321
        %v557 = vunpack.c.l.bf16 %v322
        %v558 = vunpack.c.h.bf16 %v322
        %v559 = vunpack.c.l.bf16 %v323
        %v560 = vunpack.c.h.bf16 %v323
        %v561 = vunpack.c.l.bf16 %v324
        %v562 = vunpack.c.h.bf16 %v324
        %v563 = vunpack.c.l.bf16 %v325
        %v564 = vunpack.c.h.bf16 %v325
        %v565 = vunpack.c.l.bf16 %v326
        %v566 = vunpack.c.h.bf16 %v326
        %v567 = vunpack.c.l.bf16 %v327
        %v568 = vunpack.c.h.bf16 %v327
        %v569 = vunpack.c.l.bf16 %v328
        %v570 = vunpack.c.h.bf16 %v328
        %v571 = vunpack.c.l.bf16 %v329
        %v572 = vunpack.c.h.bf16 %v329
        %v573 = vunpack.c.l.bf16 %v330
        %v574 = vunpack.c.h.bf16 %v330
        %v575 = vunpack.c.l.bf16 %v331
        %v576 = vunpack.c.h.bf16 %v331
        %v577 = vunpack.c.l.bf16 %v332
        %v578 = vunpack.c.h.bf16 %v332
        %v579 = vunpack.c.l.bf16 %v333
        %v580 = vunpack.c.h.bf16 %v333
        %v581 = vunpack.c.l.bf16 %v334
        %v582 = vunpack.c.h.bf16 %v334
        %v583 = vunpack.c.l.bf16 %v335
        %v584 = vunpack.c.h.bf16 %v335
        %v585 = vunpack.c.l.bf16 %v336
        %v586 = vunpack.c.h.bf16 %v336
        %v587 = vunpack.c.l.bf16 %v337
        %v588 = vunpack.c.h.bf16 %v337
        %v589 = vunpack.c.l.bf16 %v338
        %v590 = vunpack.c.h.bf16 %v338
        %v591 = vunpack.c.l.bf16 %v339
        %v592 = vunpack.c.h.bf16 %v339
        %v593 = vunpack.c.l.bf16 %v340
        %v594 = vunpack.c.h.bf16 %v340
        %v595 = vunpack.c.l.bf16 %v341
        %v596 = vunpack.c.h.bf16 %v341
        %v597 = vunpack.c.l.bf16 %v342
        %v598 = vunpack.c.h.bf16 %v342
        %v599 = vld [vmem:[%s2] sm:$0xff]
        %v600 = vld [vmem:[%s2 + $0x8] sm:$0xff]
        %v601 = vld [vmem:[%s2 + $0x10] sm:$0xff]
        %v602 = vld [vmem:[%s2 + $0x18] sm:$0xff]
        %v603 = vld [vmem:[%s2 + $0x20] sm:$0xff]
        %v604 = vld [vmem:[%s2 + $0x28] sm:$0xff]
        %v605 = vld [vmem:[%s2 + $0x30] sm:$0xff]
        %v606 = vld [vmem:[%s2 + $0x38] sm:$0xff]
        %s607 = sld [smem:[#allocation2]]
        %v608 = vstv %s607
        %609 = vmatpush.xpose.msra.mxu0 %v463
        %610 = vmatpush.xpose.msra.mxu0 %v455
        %611 = vmatpush.xpose.msra.mxu0 %v447
        %612 = vmatpush.xpose.msra.mxu0 %v439
        %613 = vmatpush.xpose.msra.mxu0 %v431
        %614 = vmatpush.xpose.msra.mxu0 %v423
        %615 = vmatpush.xpose.msra.mxu0 %v415
        %616 = vmatpush.xpose.msra.mxu0 %v407
        %617 = vmatpush.xpose.msra.mxu0 %v399
        %618 = vmatpush.xpose.msra.mxu0 %v391
        %619 = vmatpush.xpose.msra.mxu0 %v383
        %620 = vmatpush.xpose.msra.mxu0 %v375
        %621 = vmatpush.xpose.msra.mxu0 %v367
        %622 = vmatpush.xpose.msra.mxu0 %v359
        %623 = vmatpush.xpose.msra.mxu0 %v351
        %624 = vmatpush.xpose.msra.mxu0 %v343
        %625 = vmatmul.f32.gmra.mxu0 %v599
        %v626 = vpop.f32.mrf.mxu0
        %v627 = vadd.f32 %v608, %v626
        %628 = vdwg.mxu0
        %629 = vmatpush.xpose.msra.mxu0 %v464
        %630 = vmatpush.xpose.msra.mxu0 %v456
        %631 = vmatpush.xpose.msra.mxu0 %v448
        %632 = vmatpush.xpose.msra.mxu0 %v440
        %633 = vmatpush.xpose.msra.mxu0 %v432
        %634 = vmatpush.xpose.msra.mxu0 %v424
        %635 = vmatpush.xpose.msra.mxu0 %v416
        %636 = vmatpush.xpose.msra.mxu0 %v408
        %637 = vmatpush.xpose.msra.mxu0 %v400
        %638 = vmatpush.xpose.msra.mxu0 %v392
        %639 = vmatpush.xpose.msra.mxu0 %v384
        %640 = vmatpush.xpose.msra.mxu0 %v376
        %641 = vmatpush.xpose.msra.mxu0 %v368
        %642 = vmatpush.xpose.msra.mxu0 %v360
        %643 = vmatpush.xpose.msra.mxu0 %v352
        %644 = vmatpush.xpose.msra.mxu0 %v344
        %645 = vmatmul.f32.gmra.mxu0 %v600
        %v646 = vpop.f32.mrf.mxu0
        %v647 = vadd.f32 %v627, %v646
        %648 = vdwg.mxu0
        %649 = vmatpush.xpose.msra.mxu0 %v465
        %650 = vmatpush.xpose.msra.mxu0 %v457
        %651 = vmatpush.xpose.msra.mxu0 %v449
        %652 = vmatpush.xpose.msra.mxu0 %v441
        %653 = vmatpush.xpose.msra.mxu0 %v433
        %654 = vmatpush.xpose.msra.mxu0 %v425
        %655 = vmatpush.xpose.msra.mxu0 %v417
        %656 = vmatpush.xpose.msra.mxu0 %v409
        %657 = vmatpush.xpose.msra.mxu0 %v401
        %658 = vmatpush.xpose.msra.mxu0 %v393
        %659 = vmatpush.xpose.msra.mxu0 %v385
        %660 = vmatpush.xpose.msra.mxu0 %v377
        %661 = vmatpush.xpose.msra.mxu0 %v369
        %662 = vmatpush.xpose.msra.mxu0 %v361
        %663 = vmatpush.xpose.msra.mxu0 %v353
        %664 = vmatpush.xpose.msra.mxu0 %v345
        %665 = vmatmul.f32.gmra.mxu0 %v601
        %v666 = vpop.f32.mrf.mxu0
        %v667 = vadd.f32 %v647, %v666
        %668 = vdwg.mxu0
        %669 = vmatpush.xpose.msra.mxu0 %v466
        %670 = vmatpush.xpose.msra.mxu0 %v458
        %671 = vmatpush.xpose.msra.mxu0 %v450
        %672 = vmatpush.xpose.msra.mxu0 %v442
        %673 = vmatpush.xpose.msra.mxu0 %v434
        %674 = vmatpush.xpose.msra.mxu0 %v426
        %675 = vmatpush.xpose.msra.mxu0 %v418
        %676 = vmatpush.xpose.msra.mxu0 %v410
        %677 = vmatpush.xpose.msra.mxu0 %v402
        %678 = vmatpush.xpose.msra.mxu0 %v394
        %679 = vmatpush.xpose.msra.mxu0 %v386
        %680 = vmatpush.xpose.msra.mxu0 %v378
        %681 = vmatpush.xpose.msra.mxu0 %v370
        %682 = vmatpush.xpose.msra.mxu0 %v362
        %683 = vmatpush.xpose.msra.mxu0 %v354
        %684 = vmatpush.xpose.msra.mxu0 %v346
        %685 = vmatmul.f32.gmra.mxu0 %v602
        %v686 = vpop.f32.mrf.mxu0
        %v687 = vadd.f32 %v667, %v686
        %688 = vdwg.mxu0
        %689 = vmatpush.xpose.msra.mxu0 %v467
        %690 = vmatpush.xpose.msra.mxu0 %v459
        %691 = vmatpush.xpose.msra.mxu0 %v451
        %692 = vmatpush.xpose.msra.mxu0 %v443
        %693 = vmatpush.xpose.msra.mxu0 %v435
        %694 = vmatpush.xpose.msra.mxu0 %v427
        %695 = vmatpush.xpose.msra.mxu0 %v419
        %696 = vmatpush.xpose.msra.mxu0 %v411
        %697 = vmatpush.xpose.msra.mxu0 %v403
        %698 = vmatpush.xpose.msra.mxu0 %v395
        %699 = vmatpush.xpose.msra.mxu0 %v387
        %700 = vmatpush.xpose.msra.mxu0 %v379
        %701 = vmatpush.xpose.msra.mxu0 %v371
        %702 = vmatpush.xpose.msra.mxu0 %v363
        %703 = vmatpush.xpose.msra.mxu0 %v355
        %704 = vmatpush.xpose.msra.mxu0 %v347
        %705 = vmatmul.f32.gmra.mxu0 %v603
        %v706 = vpop.f32.mrf.mxu0
        %v707 = vadd.f32 %v687, %v706
        %708 = vdwg.mxu0
        %709 = vmatpush.xpose.msra.mxu0 %v468
        %710 = vmatpush.xpose.msra.mxu0 %v460
        %711 = vmatpush.xpose.msra.mxu0 %v452
        %712 = vmatpush.xpose.msra.mxu0 %v444
        %713 = vmatpush.xpose.msra.mxu0 %v436
        %714 = vmatpush.xpose.msra.mxu0 %v428
        %715 = vmatpush.xpose.msra.mxu0 %v420
        %716 = vmatpush.xpose.msra.mxu0 %v412
        %717 = vmatpush.xpose.msra.mxu0 %v404
        %718 = vmatpush.xpose.msra.mxu0 %v396
        %719 = vmatpush.xpose.msra.mxu0 %v388
        %720 = vmatpush.xpose.msra.mxu0 %v380
        %721 = vmatpush.xpose.msra.mxu0 %v372
        %722 = vmatpush.xpose.msra.mxu0 %v364
        %723 = vmatpush.xpose.msra.mxu0 %v356
        %724 = vmatpush.xpose.msra.mxu0 %v348
        %725 = vmatmul.f32.gmra.mxu0 %v604
        %v726 = vpop.f32.mrf.mxu0
        %v727 = vadd.f32 %v707, %v726
        %728 = vdwg.mxu0
        %729 = vmatpush.xpose.msra.mxu0 %v469
        %730 = vmatpush.xpose.msra.mxu0 %v461
        %731 = vmatpush.xpose.msra.mxu0 %v453
        %732 = vmatpush.xpose.msra.mxu0 %v445
        %733 = vmatpush.xpose.msra.mxu0 %v437
        %734 = vmatpush.xpose.msra.mxu0 %v429
        %735 = vmatpush.xpose.msra.mxu0 %v421
        %736 = vmatpush.xpose.msra.mxu0 %v413
        %737 = vmatpush.xpose.msra.mxu0 %v405
        %738 = vmatpush.xpose.msra.mxu0 %v397
        %739 = vmatpush.xpose.msra.mxu0 %v389
        %740 = vmatpush.xpose.msra.mxu0 %v381
        %741 = vmatpush.xpose.msra.mxu0 %v373
        %742 = vmatpush.xpose.msra.mxu0 %v365
        %743 = vmatpush.xpose.msra.mxu0 %v357
        %744 = vmatpush.xpose.msra.mxu0 %v349
        %745 = vmatmul.f32.gmra.mxu0 %v605
        %v746 = vpop.f32.mrf.mxu0
        %v747 = vadd.f32 %v727, %v746
        %748 = vdwg.mxu0
        %749 = vmatpush.xpose.msra.mxu0 %v470
        %750 = vmatpush.xpose.msra.mxu0 %v462
        %751 = vmatpush.xpose.msra.mxu0 %v454
        %752 = vmatpush.xpose.msra.mxu0 %v446
        %753 = vmatpush.xpose.msra.mxu0 %v438
        %754 = vmatpush.xpose.msra.mxu0 %v430
        %755 = vmatpush.xpose.msra.mxu0 %v422
        %756 = vmatpush.xpose.msra.mxu0 %v414
        %757 = vmatpush.xpose.msra.mxu0 %v406
        %758 = vmatpush.xpose.msra.mxu0 %v398
        %759 = vmatpush.xpose.msra.mxu0 %v390
        %760 = vmatpush.xpose.msra.mxu0 %v382
        %761 = vmatpush.xpose.msra.mxu0 %v374
        %762 = vmatpush.xpose.msra.mxu0 %v366
        %763 = vmatpush.xpose.msra.mxu0 %v358
        %764 = vmatpush.xpose.msra.mxu0 %v350
        %765 = vmatmul.f32.gmra.mxu0 %v606
        %v766 = vpop.f32.mrf.mxu0
        %v767 = vadd.f32 %v747, %v766
        %768 = vdwg.mxu0
        %769 = vmatpush.xpose.msra.mxu0 %v591
        %770 = vmatpush.xpose.msra.mxu0 %v583
        %771 = vmatpush.xpose.msra.mxu0 %v575
        %772 = vmatpush.xpose.msra.mxu0 %v567
        %773 = vmatpush.xpose.msra.mxu0 %v559
        %774 = vmatpush.xpose.msra.mxu0 %v551
        %775 = vmatpush.xpose.msra.mxu0 %v543
        %776 = vmatpush.xpose.msra.mxu0 %v535
        %777 = vmatpush.xpose.msra.mxu0 %v527
        %778 = vmatpush.xpose.msra.mxu0 %v519
        %779 = vmatpush.xpose.msra.mxu0 %v511
        %780 = vmatpush.xpose.msra.mxu0 %v503
        %781 = vmatpush.xpose.msra.mxu0 %v495
        %782 = vmatpush.xpose.msra.mxu0 %v487
        %783 = vmatpush.xpose.msra.mxu0 %v479
        %784 = vmatpush.xpose.msra.mxu0 %v471
        %785 = vmatmul.f32.gmra.mxu0 %v599
        %v786 = vpop.f32.mrf.mxu0
        %v787 = vadd.f32 %v608, %v786
        %788 = vdwg.mxu0
        %789 = vmatpush.xpose.msra.mxu0 %v592
        %790 = vmatpush.xpose.msra.mxu0 %v584
        %791 = vmatpush.xpose.msra.mxu0 %v576
        %792 = vmatpush.xpose.msra.mxu0 %v568
        %793 = vmatpush.xpose.msra.mxu0 %v560
        %794 = vmatpush.xpose.msra.mxu0 %v552
        %795 = vmatpush.xpose.msra.mxu0 %v544
        %796 = vmatpush.xpose.msra.mxu0 %v536
        %797 = vmatpush.xpose.msra.mxu0 %v528
        %798 = vmatpush.xpose.msra.mxu0 %v520
        %799 = vmatpush.xpose.msra.mxu0 %v512
        %800 = vmatpush.xpose.msra.mxu0 %v504
        %801 = vmatpush.xpose.msra.mxu0 %v496
        %802 = vmatpush.xpose.msra.mxu0 %v488
        %803 = vmatpush.xpose.msra.mxu0 %v480
        %804 = vmatpush.xpose.msra.mxu0 %v472
        %805 = vmatmul.f32.gmra.mxu0 %v600
        %v806 = vpop.f32.mrf.mxu0
        %v807 = vadd.f32 %v787, %v806
        %808 = vdwg.mxu0
        %809 = vmatpush.xpose.msra.mxu0 %v593
        %810 = vmatpush.xpose.msra.mxu0 %v585
        %811 = vmatpush.xpose.msra.mxu0 %v577
        %812 = vmatpush.xpose.msra.mxu0 %v569
        %813 = vmatpush.xpose.msra.mxu0 %v561
        %814 = vmatpush.xpose.msra.mxu0 %v553
        %815 = vmatpush.xpose.msra.mxu0 %v545
        %816 = vmatpush.xpose.msra.mxu0 %v537
        %817 = vmatpush.xpose.msra.mxu0 %v529
        %818 = vmatpush.xpose.msra.mxu0 %v521
        %819 = vmatpush.xpose.msra.mxu0 %v513
        %820 = vmatpush.xpose.msra.mxu0 %v505
        %821 = vmatpush.xpose.msra.mxu0 %v497
        %822 = vmatpush.xpose.msra.mxu0 %v489
        %823 = vmatpush.xpose.msra.mxu0 %v481
        %824 = vmatpush.xpose.msra.mxu0 %v473
        %825 = vmatmul.f32.gmra.mxu0 %v601
        %v826 = vpop.f32.mrf.mxu0
        %v827 = vadd.f32 %v807, %v826
        %828 = vdwg.mxu0
        %829 = vmatpush.xpose.msra.mxu0 %v594
        %830 = vmatpush.xpose.msra.mxu0 %v586
        %831 = vmatpush.xpose.msra.mxu0 %v578
        %832 = vmatpush.xpose.msra.mxu0 %v570
        %833 = vmatpush.xpose.msra.mxu0 %v562
        %834 = vmatpush.xpose.msra.mxu0 %v554
        %835 = vmatpush.xpose.msra.mxu0 %v546
        %836 = vmatpush.xpose.msra.mxu0 %v538
        %837 = vmatpush.xpose.msra.mxu0 %v530
        %838 = vmatpush.xpose.msra.mxu0 %v522
        %839 = vmatpush.xpose.msra.mxu0 %v514
        %840 = vmatpush.xpose.msra.mxu0 %v506
        %841 = vmatpush.xpose.msra.mxu0 %v498
        %842 = vmatpush.xpose.msra.mxu0 %v490
        %843 = vmatpush.xpose.msra.mxu0 %v482
        %844 = vmatpush.xpose.msra.mxu0 %v474
        %845 = vmatmul.f32.gmra.mxu0 %v602
        %v846 = vpop.f32.mrf.mxu0
        %v847 = vadd.f32 %v827, %v846
        %848 = vdwg.mxu0
        %849 = vmatpush.xpose.msra.mxu0 %v595
        %850 = vmatpush.xpose.msra.mxu0 %v587
        %851 = vmatpush.xpose.msra.mxu0 %v579
        %852 = vmatpush.xpose.msra.mxu0 %v571
        %853 = vmatpush.xpose.msra.mxu0 %v563
        %854 = vmatpush.xpose.msra.mxu0 %v555
        %855 = vmatpush.xpose.msra.mxu0 %v547
        %856 = vmatpush.xpose.msra.mxu0 %v539
        %857 = vmatpush.xpose.msra.mxu0 %v531
        %858 = vmatpush.xpose.msra.mxu0 %v523
        %859 = vmatpush.xpose.msra.mxu0 %v515
        %860 = vmatpush.xpose.msra.mxu0 %v507
        %861 = vmatpush.xpose.msra.mxu0 %v499
        %862 = vmatpush.xpose.msra.mxu0 %v491
        %863 = vmatpush.xpose.msra.mxu0 %v483
        %864 = vmatpush.xpose.msra.mxu0 %v475
        %865 = vmatmul.f32.gmra.mxu0 %v603
        %v866 = vpop.f32.mrf.mxu0
        %v867 = vadd.f32 %v847, %v866
        %868 = vdwg.mxu0
        %869 = vmatpush.xpose.msra.mxu0 %v596
        %870 = vmatpush.xpose.msra.mxu0 %v588
        %871 = vmatpush.xpose.msra.mxu0 %v580
        %872 = vmatpush.xpose.msra.mxu0 %v572
        %873 = vmatpush.xpose.msra.mxu0 %v564
        %874 = vmatpush.xpose.msra.mxu0 %v556
        %875 = vmatpush.xpose.msra.mxu0 %v548
        %876 = vmatpush.xpose.msra.mxu0 %v540
        %877 = vmatpush.xpose.msra.mxu0 %v532
        %878 = vmatpush.xpose.msra.mxu0 %v524
        %879 = vmatpush.xpose.msra.mxu0 %v516
        %880 = vmatpush.xpose.msra.mxu0 %v508
        %881 = vmatpush.xpose.msra.mxu0 %v500
        %882 = vmatpush.xpose.msra.mxu0 %v492
        %883 = vmatpush.xpose.msra.mxu0 %v484
        %884 = vmatpush.xpose.msra.mxu0 %v476
        %885 = vmatmul.f32.gmra.mxu0 %v604
        %v886 = vpop.f32.mrf.mxu0
        %v887 = vadd.f32 %v867, %v886
        %888 = vdwg.mxu0
        %889 = vmatpush.xpose.msra.mxu0 %v597
        %890 = vmatpush.xpose.msra.mxu0 %v589
        %891 = vmatpush.xpose.msra.mxu0 %v581
        %892 = vmatpush.xpose.msra.mxu0 %v573
        %893 = vmatpush.xpose.msra.mxu0 %v565
        %894 = vmatpush.xpose.msra.mxu0 %v557
        %895 = vmatpush.xpose.msra.mxu0 %v549
        %896 = vmatpush.xpose.msra.mxu0 %v541
        %897 = vmatpush.xpose.msra.mxu0 %v533
        %898 = vmatpush.xpose.msra.mxu0 %v525
        %899 = vmatpush.xpose.msra.mxu0 %v517
        %900 = vmatpush.xpose.msra.mxu0 %v509
        %901 = vmatpush.xpose.msra.mxu0 %v501
        %902 = vmatpush.xpose.msra.mxu0 %v493
        %903 = vmatpush.xpose.msra.mxu0 %v485
        %904 = vmatpush.xpose.msra.mxu0 %v477
        %905 = vmatmul.f32.gmra.mxu0 %v605
        %v906 = vpop.f32.mrf.mxu0
        %v907 = vadd.f32 %v887, %v906
        %908 = vdwg.mxu0
        %909 = vmatpush.xpose.msra.mxu0 %v598
        %910 = vmatpush.xpose.msra.mxu0 %v590
        %911 = vmatpush.xpose.msra.mxu0 %v582
        %912 = vmatpush.xpose.msra.mxu0 %v574
        %913 = vmatpush.xpose.msra.mxu0 %v566
        %914 = vmatpush.xpose.msra.mxu0 %v558
        %915 = vmatpush.xpose.msra.mxu0 %v550
        %916 = vmatpush.xpose.msra.mxu0 %v542
        %917 = vmatpush.xpose.msra.mxu0 %v534
        %918 = vmatpush.xpose.msra.mxu0 %v526
        %919 = vmatpush.xpose.msra.mxu0 %v518
        %920 = vmatpush.xpose.msra.mxu0 %v510
        %921 = vmatpush.xpose.msra.mxu0 %v502
        %922 = vmatpush.xpose.msra.mxu0 %v494
        %923 = vmatpush.xpose.msra.mxu0 %v486
        %924 = vmatpush.xpose.msra.mxu0 %v478
        %925 = vmatmul.f32.gmra.mxu0 %v606
        %v926 = vpop.f32.mrf.mxu0
        %v927 = vadd.f32 %v907, %v926
        %928 = vdwg.mxu0
        %v929 = vrot.slane %v767, 4
        %v930 = vmax.f32 %v767, %v929
        %v931 = vrot.slane %v930, 2
        %v932 = vmax.f32 %v930, %v931
        %v933 = vrot.slane %v932, 1
        %v934 = vmax.f32 %v932, %v933
        %v935 = vrot.slane %v927, 4
        %v936 = vmax.f32 %v927, %v935
        %v937 = vrot.slane %v936, 2
        %v938 = vmax.f32 %v936, %v937
        %v939 = vrot.slane %v938, 1
        %v940 = vmax.f32 %v938, %v939
        %v941 = vsub.f32 %v767, %v934
        %v942 = vsub.f32 %v927, %v940
        %v943 = vmul.f32 %v941, 1.442695
        %v944 = vpow.pop %v943
        %v945 = vmul.f32 %v942, 1.442695
        %v946 = vpow.pop %v945
        %v947 = vrot.slane %v944, 4
        %v948 = vadd.f32 %v944, %v947
        %v949 = vrot.slane %v948, 2
        %v950 = vadd.f32 %v948, %v949
        %v951 = vrot.slane %v950, 1
        %v952 = vadd.f32 %v950, %v951
        %v953 = vrot.slane %v946, 4
        %v954 = vadd.f32 %v946, %v953
        %v955 = vrot.slane %v954, 2
        %v956 = vadd.f32 %v954, %v955
        %v957 = vrot.slane %v956, 1
        %v958 = vadd.f32 %v956, %v957
        %v959 = vlog2.pop %v952
        %v960 = vmul.f32 %v959, 0.6931472
        %v961 = vlog2.pop %v958
        %v962 = vmul.f32 %v961, 0.6931472
        %v963 = vadd.f32 %v960, %v934
        %v964 = vadd.f32 %v962, %v940
        %v965 = vsub.f32 %v963, %v767
        %v966 = vsub.f32 %v964, %v927
        %967 = vst [vmem:[%s195] sm:$0xff] %v767
        %968 = vst [vmem:[%s195 + $0x8] sm:$0xff] %v927
        %v971 = vrot.slane %v966, 7
        %vm972 = vcmask 1040384
        %v973 = vsel %vm972, %v965, %v971
        %v975 = vlaneseq
        %vm976 = vcmp.ge.s32.totalorder %v975, 0
        %vm977 = vcmp.lt.s32.totalorder %v975, 256
        %vm978 = vmand %vm976, %vm977
        %979 = vst.msk [vmem:[%s213] sm:$0x3] %vm978, %v973
        %s980 = sand.u32 %s96, 1
        %s981 = scalar_lea.sflag [#allocation4], %s980
        %s982 = sand.u32 %s96, 1
        %s983 = smul.addr %s982, 16
        %s984 = scalar_lea.vmem [#allocation3], %s983
        %s985 = smul.u32 2, %s20
        %p986 = scmp.lt.s32.totalorder %s985, 3
        %s987 = scalar_select %p986, %s985, 3
        %s988 = scalar_lea.vmem %s4, %s987
        // Predicated region
        $region33: #{cross_encoder_forward.1} parent=31 // pred_check
          %p989 = pneg %p106
        $region34: #{cross_encoder_forward.1} parent=31 // pred_check_branch
          %991 = sbr.rel (%p989) target = $region36
        $region35: #{cross_encoder_forward.1} parent=31 // pred_region
          %s992 = smul.u32 2, %s20
          %994 = vsyncadd %s981, 0
          %s995 = smul.addr %s992, 8
          %s996 = scalar_lea.hbm %s3, %s995
          %s998 = sshll.u32 %s984, 4
          %s999 = int_to_ptr.vmem [resolvable:$true] %s998
          %s1000 = sshll.u32 %s996, 4
          %s1001 = int_to_ptr.hbm [resolvable:$true] %s1000
          %1003 = dma.vmem_to_hbm [thread:$0]  %s999, 256, %s1001, %s981
        $region36: #{cross_encoder_forward.1} parent=31 // pred_fallthru
          _
        // Predicated region
        $region37: #{cross_encoder_forward.1} parent=31 // pred_check
          %p1004 = pneg %p132
        $region38: #{cross_encoder_forward.1} parent=31 // pred_check_branch
          %1006 = sbr.rel (%p1004) target = $region40
        $region39: #{cross_encoder_forward.1} parent=31 // pred_region
          %s1007 = smul.u32 2, %s20
        $region40: #{cross_encoder_forward.1} parent=31 // pred_fallthru
          _
      $region32: #{cross_encoder_forward.1} parent=5 // pred_fallthru
        _
      %p1008 = scmp.le.s32.totalorder 2, %s15
      // Predicated region
      $region41: #{cross_encoder_forward.1} parent=5 // pred_check
        %p1009 = pneg %p1008
      $region42: #{cross_encoder_forward.1} parent=5 // pred_check_branch
        %1011 = sbr.rel (%p1009) target = $region44
      $region43: #{cross_encoder_forward.1} parent=5 // pred_region
        %s1012 = ssub.s32 %s15, 2
        // Predicated region
        $region45: #{cross_encoder_forward.1} parent=43 // pred_check
          %p1013 = pneg %p112
        $region46: #{cross_encoder_forward.1} parent=43 // pred_check_branch
          %1015 = sbr.rel (%p1013) target = $region48
        $region47: #{cross_encoder_forward.1} parent=43 // pred_region
          %s1016 = sand.u32 %s97, 1
          %s1017 = scalar_lea.sflag [#allocation4], %s1016
          %s1018 = sand.u32 %s97, 1
          %s1019 = smul.addr %s1018, 16
          %s1020 = scalar_lea.vmem [#allocation3], %s1019
          %1022 = dma.done %s1017, 256
        $region48: #{cross_encoder_forward.1} parent=43 // pred_fallthru
          _
        // Predicated region
        $region49: #{cross_encoder_forward.1} parent=43 // pred_check
          %p1023 = pneg %p138
        $region50: #{cross_encoder_forward.1} parent=43 // pred_check_branch
          %1025 = sbr.rel (%p1023) target = $region52
        $region51: #{cross_encoder_forward.1} parent=43 // pred_region
          %s1026 = smul.u32 2, %s21
          %p1027 = scmp.lt.s32.totalorder %s1026, 3
          %s1028 = scalar_select %p1027, %s1026, 3
          %s1029 = scalar_lea.vmem %s4, %s1028
        $region52: #{cross_encoder_forward.1} parent=43 // pred_fallthru
          _
      $region44: #{cross_encoder_forward.1} parent=5 // pred_fallthru
        _
    $region6: #{cross_encoder_forward.1} parent=1 // loop_footer
      %s19 = sadd.s32 1, %s15
    $region7: #{cross_encoder_forward.1} parent=1 // loop_footer_branch
      %14 = sbr.rel target = $region3
    $region8: #{cross_encoder_forward.1} parent=1 // loop_exit
      _
    %1030 = vsyncpa [#allocation4], 1
    %s1031 = scalar_lea.sflag [#allocation4], 1
    %1032 = vsyncpa %s1031, 1

</llo_original>
